<compile_context>
chip_gen: v7x
topology: tpu7x:2x2x1
jax: 0.10.0
libtpu: 0.0.40
codegen_flags: <defaults>
</compile_context>

<pallas_src>
import math
import functools

import jax
import jax.numpy as jnp
from jax.experimental import pallas as pl
from jax.experimental.pallas import tpu as pltpu


def _round_up(x: int, m: int) -> int:
    return ((x + m - 1) // m) * m


def _cdiv(a: int, b: int) -> int:
    return (a + b - 1) // b


def _pick_divisor_tile(extent: int, target: int, unit: int) -> int:
    """Largest multiple of `unit` that divides `extent` and is <= target."""
    q = extent // unit
    max_d = max(1, min(q, target // unit))
    for d in range(max_d, 0, -1):
        if q % d == 0:
            return d * unit
    return unit


# --------------------------- kernels ---------------------------------------

def _linear_kernel_f32_out(x_ref, w_ref, b_ref, o_ref):
    # o_ref is f32 and its index_map ignores k -> the output block stays
    # VMEM-resident across the whole K axis; accumulate into it directly.
    k = pl.program_id(2)

    @pl.when(k == 0)
    def _():
        o_ref[...] = jnp.broadcast_to(b_ref[...], o_ref.shape)

    o_ref[...] += jnp.dot(x_ref[...], w_ref[...],
                          preferred_element_type=jnp.float32)


def _linear_kernel_lowp_out(x_ref, w_ref, b_ref, o_ref, acc_ref):
    # Low-precision output: keep an f32 accumulator scratch, cast once at end.
    k = pl.program_id(2)

    @pl.when(k == 0)
    def _():
        acc_ref[...] = jnp.broadcast_to(b_ref[...], acc_ref.shape)

    acc_ref[...] += jnp.dot(x_ref[...], w_ref[...],
                            preferred_element_type=jnp.float32)

    @pl.when(k == pl.num_programs(2) - 1)
    def _():
        o_ref[...] = acc_ref[...].astype(o_ref.dtype)


# --------------------------- wrappers ---------------------------------------

def prepare_linear_params(weight, bias=None, *, compute_dtype=None):
    """One-time parameter prep (call once, NOT per forward step).

    weight: (F_out, F_in)  ->  returns w_t_pad: (F_in_pad, F_out_pad)
    bias:   (F_out,)|None  ->  returns b_pad:   (1, F_out_pad) float32
    F_in/F_out are padded to multiples of 128 (lane-dense tiles; zero K-padding
    contributes 0 to the reduction).  Optionally casts W to `compute_dtype`
    (e.g. jnp.bfloat16 for MXU-native throughput with f32 accumulation).
    """
    out_channels, in_channels = weight.shape
    k_pad = _round_up(in_channels, 128)
    n_pad = _round_up(out_channels, 128)

    w_dtype = compute_dtype if compute_dtype is not None else weight.dtype
    w_t = weight.T.astype(w_dtype)
    if (k_pad != in_channels) or (n_pad != out_channels):
        w_t = jnp.pad(w_t, ((0, k_pad - in_channels), (0, n_pad - out_channels)))

    if bias is None:
        b = jnp.zeros((1, n_pad), dtype=jnp.float32)
    else:
        b = bias.astype(jnp.float32).reshape(1, out_channels)
        if n_pad != out_channels:
            b = jnp.pad(b, ((0, 0), (0, n_pad - out_channels)))
    return w_t, b


@functools.partial(
    jax.jit, static_argnames=("out_channels", "tm_target", "tn_target", "tk_target"))
def pallas_linear_prepared(x, w_t_pad, b_pad, *, out_channels,
                           tm_target=512, tn_target=512, tk_target=1024):
    """y = x @ W^T + b using params from prepare_linear_params()."""
    in_channels = x.shape[-1]
    lead_shape = x.shape[:-1]
    k_pad, n_pad = w_t_pad.shape
    out_dtype = x.dtype
    compute_dtype = w_t_pad.dtype

    x2d = x.reshape(-1, in_channels).astype(compute_dtype)
    m = x2d.shape[0]

    itemsize = jnp.dtype(compute_dtype).itemsize
    sublane = {4: 8, 2: 16, 1: 32}.get(itemsize, 8)

    # ---- Tile selection: lane-dense K/N tiles that divide the 128-rounded
    # extents (no over-padding); M tile covers all rows when M is small so the
    # weight streams exactly once.
    tk = _pick_divisor_tile(k_pad, tk_target, 128)
    tn = _pick_divisor_tile(n_pad, tn_target, 128)

    tm_cap = _round_up(tm_target, sublane)
    small_m = m <= tm_cap
    tm = _round_up(m, sublane) if small_m else tm_cap

    grid_m = _cdiv(m, tm)
    grid_n = n_pad // tn
    # v7x megacore: make sure the parallel axes have >= 2 blocks when possible.
    if grid_m * grid_n < 2:
        if n_pad >= 2 * 128:
            tn = _pick_divisor_tile(n_pad, n_pad // 2, 128)
            grid_n = n_pad // tn
        elif m > sublane:
            tm = _round_up(_cdiv(m, 2), sublane)
            grid_m = _cdiv(m, tm)

    # Rows of the kernel's 2-D view.  Small M: pad rows to an exact tile
    # multiple (tiny copy).  Large M: never copy x along M; the ragged last
    # tile relies on masked OOB reads (garbage rows only feed garbage output
    # rows) and masked OOB writes.
    m_rows = grid_m * tm if small_m else m

    # K must be zero-padded (garbage in the contraction would corrupt the sum);
    # this is a no-op whenever F_in is already a multiple of 128.
    pad_m = m_rows - m
    pad_k = k_pad - in_channels
    if pad_m or pad_k:
        x2d = jnp.pad(x2d, ((0, pad_m), (0, pad_k)))

    grid_k = k_pad // tk
    grid = (grid_m, grid_n, grid_k)

    out_is_f32 = jnp.dtype(out_dtype) == jnp.dtype(jnp.float32)
    kernel = _linear_kernel_f32_out if out_is_f32 else _linear_kernel_lowp_out
    scratch = [] if out_is_f32 else [pltpu.VMEM((tm, tn), jnp.float32)]

    cost = pl.CostEstimate(
        flops=2 * m * k_pad * n_pad,
        transcendentals=0,
        bytes_accessed=(
            x2d.size * itemsize * grid_n                 # x re-read per N block
            + w_t_pad.size * itemsize * grid_m           # W re-read per M block
            + b_pad.size * 4 * grid_m
            + m_rows * n_pad * jnp.dtype(out_dtype).itemsize),
    )

    out = pl.pallas_call(
        kernel,
        out_shape=jax.ShapeDtypeStruct((m_rows, n_pad), out_dtype),
        grid_spec=pltpu.PrefetchScalarGridSpec(
            num_scalar_prefetch=0,
            grid=grid,
            in_specs=[
                pl.BlockSpec((tm, tk), lambda i, j, k: (i, k)),
                pl.BlockSpec((tk, tn), lambda i, j, k: (k, j)),
                pl.BlockSpec((1, tn), lambda i, j, k: (0, j)),
            ],
            out_specs=pl.BlockSpec((tm, tn), lambda i, j, k: (i, j)),
            scratch_shapes=scratch,
        ),
        compiler_params=pltpu.CompilerParams(
            dimension_semantics=("parallel", "parallel", "arbitrary"),
            # Default tiles use ~10-18 MiB double-buffered; 48 MiB gives ample
            # headroom on every generation incl. v7x (64 MiB physical VMEM).
            vmem_limit_bytes=48 * 1024 * 1024,
        ),
        cost_estimate=cost,
    )(x2d, w_t_pad, b_pad)

    out = out[:m, :out_channels]
    return out.reshape(*lead_shape, out_channels)


def pallas_linear(x, weight, bias=None, **kwargs):
    """Convenience one-shot API matching F.linear(x, weight, bias).

    Prefer prepare_linear_params() once + pallas_linear_prepared() per step;
    this path re-transposes / re-pads the weight on every call.
    """
    w_t_pad, b_pad = prepare_linear_params(weight, bias)
    return pallas_linear_prepared(x, w_t_pad, b_pad,
                                  out_channels=weight.shape[0], **kwargs)


def init_linear_params(key, in_channels, out_channels, dtype=jnp.float32):
    """Matches torch.nn.Linear default init (U(-1/sqrt(fan_in), 1/sqrt(fan_in)))."""
    kw, kb = jax.random.split(key)
    bound = 1.0 / math.sqrt(in_channels)
    weight = jax.random.uniform(
        kw, (out_channels, in_channels), dtype, minval=-bound, maxval=bound)
    bias = jax.random.uniform(
        kb, (out_channels,), dtype, minval=-bound, maxval=bound)
    return weight, bias


if __name__ == "__main__":
    # TODO(synk): lazy in_channels=-1 init and state-dict hooks of the torch
    # module are host-side framework plumbing with no kernel equivalent.
    key = jax.random.PRNGKey(0)
    k_x, k_p = jax.random.split(key)

    # Small shapes consistent with (*, F_in) -> (*, F_out).
    batch, seq, in_channels, out_channels = 2, 8, 32, 64
    x = jax.random.normal(k_x, (batch, seq, in_channels), dtype=jnp.float32)
    weight, bias = init_linear_params(k_p, in_channels, out_channels)

    # One-time param prep (weight transpose/pad hoisted out of the forward path).
    w_t_pad, b_pad = prepare_linear_params(weight, bias)
    y = pallas_linear_prepared(x, w_t_pad, b_pad, out_channels=out_channels)
    y = jax.block_until_ready(y)

    y_ref = x @ weight.T + bias
    assert y.shape == (batch, seq, out_channels)
    assert jnp.allclose(y, y_ref, atol=1e-5, rtol=1e-5)

    # Ragged M/K/N shape: multiple grid blocks, K padded 700->768, N=384 split
    # across two parallel blocks, M padded by only 4 rows.
    k2x, k2p = jax.random.split(jax.random.PRNGKey(1))
    x2 = jax.random.normal(k2x, (300, 700), dtype=jnp.float32)
    w2, b2 = init_linear_params(k2p, 700, 384)
    w2_t, b2_p = prepare_linear_params(w2, b2)
    y2 = jax.block_until_ready(
        pallas_linear_prepared(x2, w2_t, b2_p, out_channels=384))
    y2_ref = x2 @ w2.T + b2
    assert jnp.allclose(y2, y2_ref, atol=1e-4, rtol=1e-4)

    # bf16 compute (MXU-native) with f32 accumulation and f32 output.
    w3_t, b3_p = prepare_linear_params(w2, b2, compute_dtype=jnp.bfloat16)
    y3 = jax.block_until_ready(
        pallas_linear_prepared(x2, w3_t, b3_p, out_channels=384))
    assert jnp.allclose(y3, y2_ref, atol=1e-1, rtol=5e-2)

    # No-bias path via the convenience wrapper.
    y4 = jax.block_until_ready(pallas_linear(x, weight, None))
    assert jnp.allclose(y4, x @ weight.T, atol=1e-5, rtol=1e-5)

    print("KERNEL_OK")
</pallas_src>

<mosaic_0001>
module attributes {stable_mosaic.version = 11 : i64} {
  func.func @_linear_kernel_f32_out(%arg0: i32, %arg1: i32, %arg2: i32, %arg3: memref<8x128xf32, #tpu.memory_space<vmem>>, %arg4: memref<128x128xf32, #tpu.memory_space<vmem>>, %arg5: memref<1x128xf32, #tpu.memory_space<vmem>>, %arg6: memref<8x128xf32, #tpu.memory_space<vmem>>) attributes {dimension_semantics = [#tpu.dimension_semantics<parallel>, #tpu.dimension_semantics<parallel>, #tpu.dimension_semantics<arbitrary>], iteration_bounds = array<i64: 2, 1, 1>, scalar_prefetch = 0 : i64, scratch_operands = 0 : i64, tpu.core_type = #tpu.core_type<tc>, window_params = [{transform_indices = @transform_0, window_bounds = array<i64: 8, 128>}, {transform_indices = @transform_1, window_bounds = array<i64: 128, 128>}, {transform_indices = @transform_2, window_bounds = array<i64: 1, 128>}, {transform_indices = @transform_3, window_bounds = array<i64: 8, 128>}]} {
    %c0_i32 = arith.constant 0 : i32
    %0 = arith.cmpi eq, %arg2, %c0_i32 : i32
    %1 = arith.extui %0 : i1 to i32
    %c0_i32_0 = arith.constant 0 : i32
    %2 = arith.cmpi ne, %1, %c0_i32_0 : i32
    scf.if %2 {
      %c0_8 = arith.constant 0 : index
      %c0_9 = arith.constant 0 : index
      %9 = vector.load %arg5[%c0_8, %c0_9] : memref<1x128xf32, #tpu.memory_space<vmem>>, vector<1x128xf32>
      %10 = vector.shape_cast %9 : vector<1x128xf32> to vector<1x128xf32>
      %11 = vector.broadcast %10 : vector<1x128xf32> to vector<8x128xf32>
      %c0_10 = arith.constant 0 : index
      %c0_11 = arith.constant 0 : index
      %12 = vector.load %arg6[%c0_10, %c0_11] : memref<8x128xf32, #tpu.memory_space<vmem>>, vector<8x128xf32>
      tpu.vector_store %arg6[%c0_10, %c0_11], %11 {strides = array<i32>} : memref<8x128xf32, #tpu.memory_space<vmem>>, vector<8x128xf32>,
    } else {
    }
    %c0 = arith.constant 0 : index
    %c0_1 = arith.constant 0 : index
    %3 = vector.load %arg6[%c0, %c0_1] : memref<8x128xf32, #tpu.memory_space<vmem>>, vector<8x128xf32>
    %c0_2 = arith.constant 0 : index
    %c0_3 = arith.constant 0 : index
    %4 = vector.load %arg3[%c0_2, %c0_3] : memref<8x128xf32, #tpu.memory_space<vmem>>, vector<8x128xf32>
    %c0_4 = arith.constant 0 : index
    %c0_5 = arith.constant 0 : index
    %5 = vector.load %arg4[%c0_4, %c0_5] : memref<128x128xf32, #tpu.memory_space<vmem>>, vector<128x128xf32>
    %cst = arith.constant dense<0.000000e+00> : vector<8x128xf32>
    %6 = tpu.matmul %4, %5, %cst {dimension_numbers = #tpu.dot_dimension_numbers<[1], [0], [0], [1], [0, 0, 1, 1], [], []>} : vector<8x128xf32>, vector<128x128xf32>, vector<8x128xf32> -> vector<8x128xf32>
    %7 = arith.addf %3, %6 : vector<8x128xf32>
    %c0_6 = arith.constant 0 : index
    %c0_7 = arith.constant 0 : index
    %8 = vector.load %arg6[%c0_6, %c0_7] : memref<8x128xf32, #tpu.memory_space<vmem>>, vector<8x128xf32>
    tpu.vector_store %arg6[%c0_6, %c0_7], %7 {strides = array<i32>} : memref<8x128xf32, #tpu.memory_space<vmem>>, vector<8x128xf32>,
    return
  }
  func.func @transform_0(%arg0: i32, %arg1: i32, %arg2: i32) -> (i32, i32) {
    %c0_i32 = arith.constant 0 : i32
    return %arg0, %arg2 : i32, i32
  }
  func.func @transform_1(%arg0: i32, %arg1: i32, %arg2: i32) -> (i32, i32) {
    %c0_i32 = arith.constant 0 : i32
    return %arg2, %arg1 : i32, i32
  }
  func.func @transform_2(%arg0: i32, %arg1: i32, %arg2: i32) -> (i32, i32) {
    %c0_i32 = arith.constant 0 : i32
    %c0_i32_0 = arith.constant 0 : i32
    return %c0_i32, %arg1 : i32, i32
  }
  func.func @transform_3(%arg0: i32, %arg1: i32, %arg2: i32) -> (i32, i32) {
    %c0_i32 = arith.constant 0 : i32
    return %arg0, %arg1 : i32, i32
  }
}

</mosaic_0001>

<llo_original>
// kernel: pallas_linear_prepared.1
$region0: #{pallas_linear_prepared.1}
  #allocation0 [shape = 'u32[]', space=smem, size = 0x4, offset = 0x4, fixed_abs, tag = 'smem constant byte address 0x4 - core index']
  #allocation1 [shape = 'u32[144,128]{1,0:T(1,128)}', space=vmem, size = 0x12000, scoped, tag = 'internal scratch']
  %s0 = inlined_call_operand.vmem [shape: f32[16,128], index: 0, kind: input, shape index: {}]
  %s1 = inlined_call_operand.hbm [shape: f32[128,128], index: 1, kind: input, shape index: {}]
  %s2 = inlined_call_operand.vmem [shape: f32[1,128], index: 2, kind: input, shape index: {}]
  %s3 = inlined_call_operand.vmem [shape: f32[16,128], index: 3, kind: output, shape index: {}]
  %s4 = sld [smem:[#allocation0]]
  $region53: #{pallas_linear_prepared.1} parent=0
    _
  %s6 = ssub.s32 1, %s4
  %s7 = scalar_select 0, %s6, %s4
  $region1: #{pallas_linear_prepared.1} parent=0
    #allocation2 [shape = 'u8[65536]{0}', space=vmem, size = 0x10000, scoped, tag = 'input window, operand 1, single buffered']
    #allocation3 [shape = 's32[2]{0}', space=sflag, size = 0x8, scoped, tag = 'scoped memory for pallas_linear_prepared.1']
    %8 = vsyncpa [#allocation3], 0
    loop: start=0, step=1, limit=4
    $region2: #{pallas_linear_prepared.1} parent=1 // loop_pre_header
      _
    $region3: #{pallas_linear_prepared.1} parent=1 // loop_header
      %s10 = sphi 0, %s14
      %p11 = scmp.ge.s32.totalorder %s10, 4
      %s17 = sphi 0, %s36
      %s18 = sphi 0, %s32
      %s19 = sphi 0, %s28
      %s20 = sphi 0, %s17
      %s21 = sphi 0, %s18
      %s22 = sphi 0, %s19
      %s23 = sphi 0, %s20
      %s24 = sphi 0, %s21
      %s25 = sphi 0, %s22
      %s41 = sphi 0, %s43
      %s44 = sphi 0, %s41
      %s45 = sphi 0, %s44
      %s61 = sphi 0, %s45
      %s69 = sphi 0, %s71
      %s72 = sphi 0, %s69
      %s73 = sphi 0, %s72
      %s89 = sphi 0, %s73
      %s95 = sphi 0, %s97
      %s98 = sphi 0, %s95
      %s99 = sphi 0, %s98
      %s115 = sphi 0, %s99
      %s123 = sphi 0, %s125
      %s126 = sphi 0, %s123
      %s127 = sphi 0, %s126
      %s143 = sphi 0, %s127
    $region4: #{pallas_linear_prepared.1} parent=1 // loop_header_branch
      %13 = sbr.rel (%p11) target = $region8
    $region5: #{pallas_linear_prepared.1} parent=1 // loop_body
      %s15 = ssub.s32 %s10, 1
      %s16 = ssub.s32 %s10, 2
      %s26 = sadd.s32 1, %s19
      %p27 = scmp.ge.s32.totalorder %s26, 1
      %s28 = scalar_select %p27, 0, %s26
      %s29 = sadd.s32 1, %s18
      %s30 = scalar_select %p27, %s29, %s18
      %p31 = scmp.ge.s32.totalorder %s30, 1
      %s32 = scalar_select %p31, 0, %s30
      %s33 = sadd.s32 1, %s17
      %s34 = scalar_select %p31, %s33, %s17
      %p35 = scmp.ge.s32.totalorder %s34, 2
      %s36 = scalar_select %p35, 0, %s34
      %s37 = ssub.s32 %s17, %s36
      %s38 = ssub.s32 %s19, %s28
      %s39 = sor.u32 %s37, %s38
      %p40 = scmp.eq.s32.totalorder %s39, 0
      %s42 = sadd.s32 %s41, 1
      %s43 = scalar_select %p40, %s41, %s42
      %p46 = pneg %p40
      %p47 = scmp.eq.s32.totalorder %s10, 1
      %p48 = por %p46, %p47
      %p49 = scmp.ne.s32.totalorder %s41, %s44
      %p50 = scmp.eq.s32.totalorder %s10, 0
      %p51 = por %p49, %p50
      %p52 = scmp.ne.s32.totalorder %s41, %s44
      %p53 = scmp.eq.s32.totalorder %s15, 1
      %p54 = por %p52, %p53
      %p55 = scmp.ne.s32.totalorder %s44, %s45
      %p56 = scmp.eq.s32.totalorder %s15, 0
      %p57 = por %p55, %p56
      %p58 = scmp.ne.s32.totalorder %s44, %s45
      %p59 = scmp.eq.s32.totalorder %s16, 1
      %p60 = por %p58, %p59
      %p62 = scmp.ne.s32.totalorder %s45, %s61
      %p63 = scmp.eq.s32.totalorder %s16, 0
      %p64 = por %p62, %p63
      %s65 = ssub.s32 %s19, %s28
      %s66 = ssub.s32 %s18, %s32
      %s67 = sor.u32 %s65, %s66
      %p68 = scmp.eq.s32.totalorder %s67, 0
      %s70 = sadd.s32 %s69, 1
      %s71 = scalar_select %p68, %s69, %s70
      %p74 = pneg %p68
      %p75 = scmp.eq.s32.totalorder %s10, 1
      %p76 = por %p74, %p75
      %p77 = scmp.ne.s32.totalorder %s69, %s72
      %p78 = scmp.eq.s32.totalorder %s10, 0
      %p79 = por %p77, %p78
      %p80 = scmp.ne.s32.totalorder %s69, %s72
      %p81 = scmp.eq.s32.totalorder %s15, 1
      %p82 = por %p80, %p81
      %p83 = scmp.ne.s32.totalorder %s72, %s73
      %p84 = scmp.eq.s32.totalorder %s15, 0
      %p85 = por %p83, %p84
      %p86 = scmp.ne.s32.totalorder %s72, %s73
      %p87 = scmp.eq.s32.totalorder %s16, 1
      %p88 = por %p86, %p87
      %p90 = scmp.ne.s32.totalorder %s73, %s89
      %p91 = scmp.eq.s32.totalorder %s16, 0
      %p92 = por %p90, %p91
      %s93 = ssub.s32 %s18, %s32
      %p94 = scmp.eq.s32.totalorder %s93, 0
      %s96 = sadd.s32 %s95, 1
      %s97 = scalar_select %p94, %s95, %s96
      %p100 = pneg %p94
      %p101 = scmp.eq.s32.totalorder %s10, 1
      %p102 = por %p100, %p101
      %p103 = scmp.ne.s32.totalorder %s95, %s98
      %p104 = scmp.eq.s32.totalorder %s10, 0
      %p105 = por %p103, %p104
      %p106 = scmp.ne.s32.totalorder %s95, %s98
      %p107 = scmp.eq.s32.totalorder %s15, 1
      %p108 = por %p106, %p107
      %p109 = scmp.ne.s32.totalorder %s98, %s99
      %p110 = scmp.eq.s32.totalorder %s15, 0
      %p111 = por %p109, %p110
      %p112 = scmp.ne.s32.totalorder %s98, %s99
      %p113 = scmp.eq.s32.totalorder %s16, 1
      %p114 = por %p112, %p113
      %p116 = scmp.ne.s32.totalorder %s99, %s115
      %p117 = scmp.eq.s32.totalorder %s16, 0
      %p118 = por %p116, %p117
      %s119 = ssub.s32 %s17, %s36
      %s120 = ssub.s32 %s18, %s32
      %s121 = sor.u32 %s119, %s120
      %p122 = scmp.eq.s32.totalorder %s121, 0
      %s124 = sadd.s32 %s123, 1
      %s125 = scalar_select %p122, %s123, %s124
      %p128 = pneg %p122
      %p129 = scmp.eq.s32.totalorder %s10, 1
      %p130 = por %p128, %p129
      %p131 = scmp.ne.s32.totalorder %s123, %s126
      %p132 = scmp.eq.s32.totalorder %s10, 0
      %p133 = por %p131, %p132
      %p134 = scmp.ne.s32.totalorder %s123, %s126
      %p135 = scmp.eq.s32.totalorder %s15, 1
      %p136 = por %p134, %p135
      %p137 = scmp.ne.s32.totalorder %s126, %s127
      %p138 = scmp.eq.s32.totalorder %s15, 0
      %p139 = por %p137, %p138
      %p140 = scmp.ne.s32.totalorder %s126, %s127
      %p141 = scmp.eq.s32.totalorder %s16, 1
      %p142 = por %p140, %p141
      %p144 = scmp.ne.s32.totalorder %s127, %s143
      %p145 = scmp.eq.s32.totalorder %s16, 0
      %p146 = por %p144, %p145
      %p147 = scmp.le.s32.totalorder 1, %s10
      %p148 = scmp.lt.s32.totalorder %s10, 3
      %p149 = pnand %p147, %p148
      %p150 = pneg %p149
      // Predicated region
      $region9: #{pallas_linear_prepared.1} parent=5 // pred_check
        _
      $region10: #{pallas_linear_prepared.1} parent=5 // pred_check_branch
        %152 = sbr.rel (%p149) target = $region12
      $region11: #{pallas_linear_prepared.1} parent=5 // pred_region
        %s153 = ssub.s32 %s10, 1
        // Predicated region
        $region13: #{pallas_linear_prepared.1} parent=11 // pred_check
          %p154 = pneg %p85
        $region14: #{pallas_linear_prepared.1} parent=11 // pred_check_branch
          %156 = sbr.rel (%p154) target = $region16
        $region15: #{pallas_linear_prepared.1} parent=11 // pred_region
          %s157 = smul.u32 16, %s22
          %s159 = ssub.s32 2048, 2048
          %160 = vsyncadd [#allocation3], %s159
          %s161 = sadd.s32 %s21, %s157
          %s162 = smul.addr %s161, 128
          %s163 = scalar_lea.hbm %s1, %s162
          %s164 = sshll.u32 [#allocation2], 4
          %s165 = int_to_ptr.vmem [resolvable:$true] %s164
          %170 = dma.hbm_to_vmem [thread:$0]  %s163, 2048, %s165, [#allocation3], 128, 128, 8
        $region16: #{pallas_linear_prepared.1} parent=11 // pred_fallthru
          _
        // Predicated region
        $region17: #{pallas_linear_prepared.1} parent=11 // pred_check
          %p171 = pneg %p111
        $region18: #{pallas_linear_prepared.1} parent=11 // pred_check_branch
          %173 = sbr.rel (%p171) target = $region20
        $region19: #{pallas_linear_prepared.1} parent=11 // pred_region
          %p174 = scmp.lt.s32.totalorder %s21, 0
          %s175 = scalar_select %p174, %s21, 0
          %s176 = scalar_lea.vmem %s2, %s175
        $region20: #{pallas_linear_prepared.1} parent=11 // pred_fallthru
          _
      $region12: #{pallas_linear_prepared.1} parent=5 // pred_fallthru
        _
      %p177 = scmp.lt.s32.totalorder %s10, 2
      // Predicated region
      $region21: #{pallas_linear_prepared.1} parent=5 // pred_check
        %p178 = pneg %p177
      $region22: #{pallas_linear_prepared.1} parent=5 // pred_check_branch
        %180 = sbr.rel (%p178) target = $region24
      $region23: #{pallas_linear_prepared.1} parent=5 // pred_region
        // Predicated region
        $region25: #{pallas_linear_prepared.1} parent=23 // pred_check
          %p181 = pneg %p51
        $region26: #{pallas_linear_prepared.1} parent=23 // pred_check_branch
          %183 = sbr.rel (%p181) target = $region28
        $region27: #{pallas_linear_prepared.1} parent=23 // pred_region
          %p184 = scmp.lt.s32.totalorder %s17, 1
          %s185 = scalar_select %p184, %s17, 1
          %p186 = scmp.lt.s32.totalorder %s19, 0
          %s187 = scalar_select %p186, %s19, 0
          %s188 = sadd.s32 %s187, %s185
          %s189 = smul.addr %s188, 8
          %s190 = scalar_lea.vmem %s0, %s189
        $region28: #{pallas_linear_prepared.1} parent=23 // pred_fallthru
          _
      $region24: #{pallas_linear_prepared.1} parent=5 // pred_fallthru
        _
      %p191 = scmp.le.s32.totalorder 1, %s10
      %p192 = scmp.lt.s32.totalorder %s10, 3
      %p193 = pnand %p191, %p192
      %p194 = pneg %p193
      // Predicated region
      $region29: #{pallas_linear_prepared.1} parent=5 // pred_check
        _
      $region30: #{pallas_linear_prepared.1} parent=5 // pred_check_branch
        %196 = sbr.rel (%p193) target = $region32
      $region31: #{pallas_linear_prepared.1} parent=5 // pred_region
        %s197 = ssub.s32 %s10, 1
        // Predicated region
        $region33: #{pallas_linear_prepared.1} parent=31 // pred_check
          %p198 = pneg %p85
        $region34: #{pallas_linear_prepared.1} parent=31 // pred_check_branch
          %200 = sbr.rel (%p198) target = $region36
        $region35: #{pallas_linear_prepared.1} parent=31 // pred_region
          %201 = dma.done [#allocation3], 2048
        $region36: #{pallas_linear_prepared.1} parent=31 // pred_fallthru
          _
        %p202 = scmp.lt.s32.totalorder %s20, 1
        %s203 = scalar_select %p202, %s20, 1
        %p204 = scmp.lt.s32.totalorder %s22, 0
        %s205 = scalar_select %p204, %s22, 0
        %s206 = sadd.s32 %s205, %s203
        %s207 = smul.addr %s206, 8
        %s208 = scalar_lea.vmem %s0, %s207
        %p209 = pneg %p57
        %p210 = pneg %p54
        %p211 = pneg %p85
        %p212 = pneg %p82
        %p213 = scmp.lt.s32.totalorder %s21, 0
        %s214 = scalar_select %p213, %s21, 0
        %s215 = scalar_lea.vmem %s2, %s214
        %p216 = pneg %p111
        %p217 = pneg %p108
        %p218 = pneg %p139
        %p219 = pneg %p136
        %p220 = scmp.lt.s32.totalorder %s20, 1
        %s221 = scalar_select %p220, %s20, 1
        %p222 = scmp.lt.s32.totalorder %s21, 0
        %s223 = scalar_select %p222, %s21, 0
        %s224 = sadd.s32 %s223, %s221
        %s225 = smul.addr %s224, 8
        %s226 = scalar_lea.vmem %s3, %s225
        %p227 = scmp.lt.s32.totalorder %s20, 1
        %s228 = scalar_select %p227, %s20, 1
        %p229 = scmp.lt.s32.totalorder %s22, 0
        %s230 = scalar_select %p229, %s22, 0
        %s231 = sadd.s32 %s230, %s228
        %s232 = smul.addr %s231, 8
        %s233 = scalar_lea.vmem %s0, %s232
        %s234 = smul.u32 16, %s22
        %p235 = scmp.lt.s32.totalorder %s21, 0
        %s236 = scalar_select %p235, %s21, 0
        %s237 = scalar_lea.vmem %s2, %s236
        %p238 = scmp.lt.s32.totalorder %s20, 1
        %s239 = scalar_select %p238, %s20, 1
        %p240 = scmp.lt.s32.totalorder %s21, 0
        %s241 = scalar_select %p240, %s21, 0
        %s242 = sadd.s32 %s241, %s239
        %s243 = smul.addr %s242, 8
        %s244 = scalar_lea.vmem %s3, %s243
        %p245 = scmp.eq.s32.totalorder %s22, 0
        // Predicated region
        $region37: #{pallas_linear_prepared.1} parent=31 // pred_check
          %p246 = pneg %p245
        $region38: #{pallas_linear_prepared.1} parent=31 // pred_check_branch
          %248 = sbr.rel (%p246) target = $region40
        $region39: #{pallas_linear_prepared.1} parent=31 // pred_region
          %v249 = vld [vmem:[%s237] sm:$0x1]
          %v251 = vlaneseq
          %v252 = vshrl.u32 %v251, 7
          %v253 = vsub.s32 0, %v252
          %v254 = vrot.slane %v249, %v253
          %256 = vst [vmem:[%s244] sm:$0xff] %v254
        $region40: #{pallas_linear_prepared.1} parent=31 // pred_fallthru
          _
        %v257 = vld [vmem:[%s244] sm:$0xff]
        %v258 = vld [vmem:[%s233] sm:$0xff]
        %v259 = vld [vmem:[#allocation2] sm:$0xff]
        %v260 = vld [vmem:[#allocation2 + $0x8] sm:$0xff]
        %v261 = vld [vmem:[#allocation2 + $0x10] sm:$0xff]
        %v262 = vld [vmem:[#allocation2 + $0x18] sm:$0xff]
        %v263 = vld [vmem:[#allocation2 + $0x20] sm:$0xff]
        %v264 = vld [vmem:[#allocation2 + $0x28] sm:$0xff]
        %v265 = vld [vmem:[#allocation2 + $0x30] sm:$0xff]
        %v266 = vld [vmem:[#allocation2 + $0x38] sm:$0xff]
        %v267 = vld [vmem:[#allocation2 + $0x40] sm:$0xff]
        %v268 = vld [vmem:[#allocation2 + $0x48] sm:$0xff]
        %v269 = vld [vmem:[#allocation2 + $0x50] sm:$0xff]
        %v270 = vld [vmem:[#allocation2 + $0x58] sm:$0xff]
        %v271 = vld [vmem:[#allocation2 + $0x60] sm:$0xff]
        %v272 = vld [vmem:[#allocation2 + $0x68] sm:$0xff]
        %v273 = vld [vmem:[#allocation2 + $0x70] sm:$0xff]
        %v274 = vld [vmem:[#allocation2 + $0x78] sm:$0xff]
        %275 = vmatprep.subr.mxu0 0.0
        %276 = vmatpush1.msra.mxu0 %v259
        %277 = vmatprep.subr.mxu0 0.0
        %278 = vmatpush1.msra.mxu0 %v260
        %279 = vmatprep.subr.mxu0 0.0
        %280 = vmatpush1.msra.mxu0 %v261
        %281 = vmatprep.subr.mxu0 0.0
        %282 = vmatpush1.msra.mxu0 %v262
        %283 = vmatprep.subr.mxu0 0.0
        %284 = vmatpush1.msra.mxu0 %v263
        %285 = vmatprep.subr.mxu0 0.0
        %286 = vmatpush1.msra.mxu0 %v264
        %287 = vmatprep.subr.mxu0 0.0
        %288 = vmatpush1.msra.mxu0 %v265
        %289 = vmatprep.subr.mxu0 0.0
        %290 = vmatpush1.msra.mxu0 %v266
        %291 = vmatprep.subr.mxu0 0.0
        %292 = vmatpush1.msra.mxu0 %v267
        %293 = vmatprep.subr.mxu0 0.0
        %294 = vmatpush1.msra.mxu0 %v268
        %295 = vmatprep.subr.mxu0 0.0
        %296 = vmatpush1.msra.mxu0 %v269
        %297 = vmatprep.subr.mxu0 0.0
        %298 = vmatpush1.msra.mxu0 %v270
        %299 = vmatprep.subr.mxu0 0.0
        %300 = vmatpush1.msra.mxu0 %v271
        %301 = vmatprep.subr.mxu0 0.0
        %302 = vmatpush1.msra.mxu0 %v272
        %303 = vmatprep.subr.mxu0 0.0
        %304 = vmatpush1.msra.mxu0 %v273
        %305 = vmatprep.subr.mxu0 0.0
        %306 = vmatpush1.msra.mxu0 %v274
        %307 = vmatprep.subr.mxu0 0.0
        %308 = vmatpush1.msra.mxu0 0.0
        %309 = vmatprep.subr.mxu0 0.0
        %310 = vmatpush1.msra.mxu0 0.0
        %311 = vmatprep.subr.mxu0 0.0
        %312 = vmatpush1.msra.mxu0 0.0
        %313 = vmatprep.subr.mxu0 0.0
        %314 = vmatpush1.msra.mxu0 0.0
        %315 = vmatprep.subr.mxu0 0.0
        %316 = vmatpush1.msra.mxu0 0.0
        %317 = vmatprep.subr.mxu0 0.0
        %318 = vmatpush1.msra.mxu0 0.0
        %319 = vmatprep.subr.mxu0 0.0
        %320 = vmatpush1.msra.mxu0 0.0
        %321 = vmatprep.subr.mxu0 0.0
        %322 = vmatpush1.msra.mxu0 0.0
        %323 = vmatprep.subr.mxu0 0.0
        %324 = vmatpush1.msra.mxu0 0.0
        %325 = vmatprep.subr.mxu0 0.0
        %326 = vmatpush1.msra.mxu0 0.0
        %327 = vmatprep.subr.mxu0 0.0
        %328 = vmatpush1.msra.mxu0 0.0
        %329 = vmatprep.subr.mxu0 0.0
        %330 = vmatpush1.msra.mxu0 0.0
        %331 = vmatprep.subr.mxu0 0.0
        %332 = vmatpush1.msra.mxu0 0.0
        %333 = vmatprep.subr.mxu0 0.0
        %334 = vmatpush1.msra.mxu0 0.0
        %335 = vmatprep.subr.mxu0 0.0
        %336 = vmatpush1.msra.mxu0 0.0
        %337 = vmatprep.subr.mxu0 0.0
        %338 = vmatpush1.msra.mxu0 0.0
        %339 = vmatprep.mubr.f32.mxu0 0.0
        %340 = vmatmul.mubr.f32.gmra.mrb[0].mxu0 %v258
        %v341 = vpop.f32.mrb[0].mxu0
        %v342 = vadd.f32 0.0, %v341
        %v343 = vpop.f32.mrb[0].mxu0
        %344 = vdwg.mxu0
        %v345 = vadd.f32 %v257, %v342
        %346 = vst [vmem:[%s244] sm:$0xff] %v345
        %p347 = scmp.lt.s32.totalorder %s20, 1
        %s348 = scalar_select %p347, %s20, 1
        %p349 = scmp.lt.s32.totalorder %s21, 0
        %s350 = scalar_select %p349, %s21, 0
        %s351 = sadd.s32 %s350, %s348
        %s352 = smul.addr %s351, 8
        %s353 = scalar_lea.vmem %s3, %s352
        // Predicated region
        $region41: #{pallas_linear_prepared.1} parent=31 // pred_check
          %p354 = pneg %p136
        $region42: #{pallas_linear_prepared.1} parent=31 // pred_check_branch
          %356 = sbr.rel (%p354) target = $region44
        $region43: #{pallas_linear_prepared.1} parent=31 // pred_region
          _
        $region44: #{pallas_linear_prepared.1} parent=31 // pred_fallthru
          _
      $region32: #{pallas_linear_prepared.1} parent=5 // pred_fallthru
        _
      %p357 = scmp.le.s32.totalorder 2, %s10
      // Predicated region
      $region45: #{pallas_linear_prepared.1} parent=5 // pred_check
        %p358 = pneg %p357
      $region46: #{pallas_linear_prepared.1} parent=5 // pred_check_branch
        %360 = sbr.rel (%p358) target = $region48
      $region47: #{pallas_linear_prepared.1} parent=5 // pred_region
        %s361 = ssub.s32 %s10, 2
        // Predicated region
        $region49: #{pallas_linear_prepared.1} parent=47 // pred_check
          %p362 = pneg %p142
        $region50: #{pallas_linear_prepared.1} parent=47 // pred_check_branch
          %364 = sbr.rel (%p362) target = $region52
        $region51: #{pallas_linear_prepared.1} parent=47 // pred_region
          %p365 = scmp.lt.s32.totalorder %s23, 1
          %s366 = scalar_select %p365, %s23, 1
          %p367 = scmp.lt.s32.totalorder %s24, 0
          %s368 = scalar_select %p367, %s24, 0
          %s369 = sadd.s32 %s368, %s366
          %s370 = smul.addr %s369, 8
          %s371 = scalar_lea.vmem %s3, %s370
        $region52: #{pallas_linear_prepared.1} parent=47 // pred_fallthru
          _
      $region48: #{pallas_linear_prepared.1} parent=5 // pred_fallthru
        _
    $region6: #{pallas_linear_prepared.1} parent=1 // loop_footer
      %s14 = sadd.s32 1, %s10
    $region7: #{pallas_linear_prepared.1} parent=1 // loop_footer_branch
      %9 = sbr.rel target = $region3
    $region8: #{pallas_linear_prepared.1} parent=1 // loop_exit
      _
    %372 = vsyncpa [#allocation3], 1
    %s373 = scalar_lea.sflag [#allocation3], 1
    %374 = vsyncpa %s373, 1

</llo_original>
